<compile_context>
chip_gen: v6e
topology: v6e:2x2x1
jax: 0.10.0
libtpu: 0.0.40
codegen_flags: <defaults>
</compile_context>

<pallas_src>
import jax
import jax.numpy as jnp
from jax import lax
from jax.experimental import pallas as pl
from jax.experimental.pallas import tpu as pltpu

EFF_TYPE2ID = {'effective': 2, 'adequate': 1, 'ineffective': 0}
CHOICE_MAP = {'effective': 'effective', 'adequate': 'adequate',
              'ineffective': 'ineffective', 'valid': 'effective',
              'true': 'effective', 'weak': 'ineffective',
              'strong': 'adequate', 'sound': 'effective'}
# choice index -> effectiveness class id, baked into the kernel as a constant
CHOICE_CLS = tuple(EFF_TYPE2ID[v] for v in CHOICE_MAP.values())  # (2,1,0,2,2,0,1,2)
NUM_CLASSES = 3


# ---------------------------------------------------------------------------
# Fused prompt-head kernel (one batch tile per grid step, batch on lanes).
#   x_ref   [TB, H]  bf16  hidden states at the [MASK] positions (tile i)
#   w_ref   [C,  H]  bf16  MLM-head rows for the 8 choice token ids
#   b_ref   [C,  1]  f32   MLM-head bias at the 8 choice token ids
#   lab_ref [1, TB]  i32   labels (padding rows carry -1)
# outputs:
#   probs_ref [3, TB] f32  squeezed class probabilities (transposed)
#   loss_ref  [1, 1]  f32  per-tile partial sum of -log p(label)   (SMEM)
# ---------------------------------------------------------------------------
def prompt_head_kernel(x_ref, w_ref, b_ref, lab_ref, probs_ref, loss_ref):
    C = w_ref.shape[0]           # 8 prompt choices (sublane axis)
    TB = x_ref.shape[0]          # batch tile (lane axis of all results)
    K = NUM_CLASSES

    # choice logits, batch on the 128-lane axis:
    #   [C, TB] = w[C, H] . x[TB, H]^T   (contract H on the MXU, bf16 operands)
    logits_t = lax.dot_general(
        w_ref[...], x_ref[...],
        dimension_numbers=(((1,), (1,)), ((), ())),
        preferred_element_type=jnp.float32)
    logits_t = logits_t + b_ref[...]                       # [C, TB] + [C, 1]

    # softmax over the 8 choices (sublane reduction), max-subtracted, f32
    m = jnp.max(logits_t, axis=0, keepdims=True)           # [1, TB]
    e = jnp.exp(logits_t - m)                              # [C, TB]
    denom = jnp.sum(e, axis=0, keepdims=True)              # [1, TB]

    # choice -> class map built in-kernel from iota + splat constants only
    c_idx = lax.broadcasted_iota(jnp.int32, (K, C), 1)
    cls_of_c = jnp.full((K, C), CHOICE_CLS[C - 1], jnp.int32)
    for c in range(C - 2, -1, -1):
        cls_of_c = jnp.where(c_idx == c, CHOICE_CLS[c], cls_of_c)
    k_idx = lax.broadcasted_iota(jnp.int32, (K, C), 0)
    map_t = (cls_of_c == k_idx).astype(jnp.float32)        # [K, C]

    # scatter-add the 8 choice masses into 3 effectiveness classes
    cls = jnp.dot(map_t, e, preferred_element_type=jnp.float32)   # [K, TB]

    # squeezed probabilities — exact division so each column sums to 1
    probs_ref[...] = cls / denom

    # per-tile partial NLL: -sum_b log(cls[label_b, b] / denom[b]).
    # Clamp avoids log(0) -> -inf if an entire class underflows; padding rows
    # (label == -1) match no class row and contribute exactly 0.
    logp = jnp.log(jnp.maximum(cls, 1e-30)) - jnp.log(denom)      # [K, TB]
    pick = lax.broadcasted_iota(jnp.int32, (K, TB), 0) == lab_ref[...]
    loss_ref[0, 0] = -jnp.sum(jnp.where(pick, logp, 0.0))


def prompt_head(hidden_mask_bf16, w_rows_bf16, b_col, labels_row, *, tb=512):
    """Tiled fused prompt head.

    Returns (probs_t [3, Bp], loss_partials [num_tiles, 1]); caller slices the
    first B columns, transposes, and finishes the mean loss.
    """
    B, H = hidden_mask_bf16.shape
    C = w_rows_bf16.shape[0]

    if B <= tb:
        TB, Bp = B, B                      # single full-array block
    else:
        TB = tb                            # multiple of 128 (lane axis tiles)
        Bp = pl.cdiv(B, TB) * TB
        if Bp != B:
            hidden_mask_bf16 = jnp.pad(hidden_mask_bf16, ((0, Bp - B), (0, 0)))
            labels_row = jnp.pad(labels_row, ((0, 0), (0, Bp - B)),
                                 constant_values=-1)
    num_tiles = Bp // TB

    return pl.pallas_call(
        prompt_head_kernel,
        out_shape=(jax.ShapeDtypeStruct((NUM_CLASSES, Bp), jnp.float32),
                   jax.ShapeDtypeStruct((num_tiles, 1), jnp.float32)),
        grid=(num_tiles,),
        in_specs=[pl.BlockSpec((TB, H), lambda i: (i, 0)),   # x: streamed
                  pl.BlockSpec((C, H), lambda i: (0, 0)),    # w: replicated
                  pl.BlockSpec((C, 1), lambda i: (0, 0)),    # bias: replicated
                  pl.BlockSpec((1, TB), lambda i: (0, i))],  # labels (int32)
        out_specs=(pl.BlockSpec((NUM_CLASSES, TB), lambda i: (0, i)),
                   pl.BlockSpec((1, 1), lambda i: (i, 0),
                                memory_space=pltpu.MemorySpace.SMEM)),
        compiler_params=pltpu.CompilerParams(
            dimension_semantics=("parallel",)),
    )(hidden_mask_bf16, w_rows_bf16, b_col, labels_row)


# ---------------------------------------------------------------------------
# Wrapper reproducing PromptPretrainedModel.forward semantics.
# ---------------------------------------------------------------------------
def prompt_model_forward(input_ids, labels, params, mask_token_id, choice_ids):
    B, S = input_ids.shape

    # Synthetic backbone hidden state ONLY at the [MASK] position of each
    # example (embed B rows instead of materializing [B, S, H]).
    # TODO(synk): stands in for the pretrained HF MLM transformer backbone.
    mask_pos = jnp.argmax(input_ids == mask_token_id, axis=1)            # [B]
    ids_at_mask = jnp.take_along_axis(input_ids, mask_pos[:, None], axis=1)[:, 0]
    hidden_mask = (jnp.take(params['emb'], ids_at_mask, axis=0)
                   + jnp.take(params['pos'], mask_pos, axis=0))          # [B, H]

    # MLM head stored [V, H] (HF decoder layout) -> contiguous row gather of
    # the 8 choice rows + bias gather (no [B*S, V] vocab projection ever).
    w_rows = jnp.take(params['w_head'], choice_ids, axis=0)              # [C, H]
    b_col = jnp.take(params['b_head'], choice_ids, axis=0).reshape(-1, 1)

    # bf16 matmul operands; softmax / loss math stays f32 inside the kernel.
    x_bf = hidden_mask.astype(jnp.bfloat16)
    w_bf = w_rows.astype(jnp.bfloat16)

    lab_arr = labels if labels is not None else jnp.zeros((B,), jnp.int32)
    lab_row = lab_arr.astype(jnp.int32).reshape(1, B)

    probs_t, loss_parts = prompt_head(x_bf, w_bf, b_col, lab_row)
    squeezed_probs = probs_t[:, :B].T                                    # [B, 3]

    # TODO(synk): torch nll_loss ignore_index / mean-over-valid semantics are
    # not reproduced; all labels here are valid so mean == sum / B.
    loss = (jnp.sum(loss_parts) / B) if labels is not None else None
    return squeezed_probs, loss


if __name__ == "__main__":
    B, S, H, V = 2, 16, 32, 256
    MASK_ID = 4

    key = jax.random.PRNGKey(0)
    k_ids, k_emb, k_pos, k_w, k_lab = jax.random.split(key, 5)

    # deterministic synthetic "tokenized" input, one [MASK] per sentence
    input_ids = jax.random.randint(k_ids, (B, S), 5, V, dtype=jnp.int32)
    mask_positions = jnp.array([5, 9], dtype=jnp.int32)
    input_ids = input_ids.at[jnp.arange(B), mask_positions].set(MASK_ID)

    # deterministic parameters (synthetic backbone / MLM head, head is [V, H])
    params = {
        'emb': jax.random.normal(k_emb, (V, H), jnp.float32) * 0.02,
        'pos': jax.random.normal(k_pos, (S, H), jnp.float32) * 0.02,
        'w_head': jax.random.normal(k_w, (V, H), jnp.float32) * 0.02,
        'b_head': jnp.zeros((V,), jnp.float32),
    }

    # token ids of the 8 prompt choices (choice->class map is baked in-kernel)
    choice_ids = jnp.array([10, 20, 30, 40, 50, 60, 70, 80], dtype=jnp.int32)
    labels = jax.random.randint(k_lab, (B,), 0, 3, dtype=jnp.int32)

    squeezed_probs, loss = prompt_model_forward(
        input_ids, labels, params, MASK_ID, choice_ids)
    jax.block_until_ready((squeezed_probs, loss))

    assert squeezed_probs.shape == (B, 3)
    assert bool(jnp.all(jnp.isfinite(squeezed_probs)))
    # probabilities over 3 classes should sum to ~1 per row (exact division)
    assert bool(jnp.all(jnp.abs(jnp.sum(squeezed_probs, axis=-1) - 1.0) < 1e-3))
    assert bool(jnp.isfinite(loss))
    print("KERNEL_OK")
</pallas_src>

<mosaic_0001>
module attributes {stable_mosaic.version = 11 : i64} {
  func.func @prompt_head_kernel(%arg0: i32, %arg1: memref<2x32xbf16, #tpu.memory_space<vmem>>, %arg2: memref<8x32xbf16, #tpu.memory_space<vmem>>, %arg3: memref<8x1xf32, #tpu.memory_space<vmem>>, %arg4: memref<1x2xi32, #tpu.memory_space<vmem>>, %arg5: memref<3x2xf32, #tpu.memory_space<vmem>>, %arg6: memref<1x1xf32, #tpu.memory_space<smem>>) attributes {dimension_semantics = [#tpu.dimension_semantics<parallel>], iteration_bounds = array<i64: 1>, scalar_prefetch = 0 : i64, scratch_operands = 0 : i64, tpu.core_type = #tpu.core_type<tc>, window_params = [{transform_indices = @transform_0, window_bounds = array<i64: 2, 32>}, {pipeline_mode = #tpu.pipeline_mode<synchronous>, transform_indices = @transform_1, window_bounds = array<i64: 8, 32>}, {pipeline_mode = #tpu.pipeline_mode<synchronous>, transform_indices = @transform_2, window_bounds = array<i64: 8, 1>}, {transform_indices = @transform_3, window_bounds = array<i64: 1, 2>}, {transform_indices = @transform_4, window_bounds = array<i64: 3, 2>}, {transform_indices = @transform_5, window_bounds = array<i64: 1, 1>}]} {
    %c0 = arith.constant 0 : index
    %c0_0 = arith.constant 0 : index
    %0 = vector.load %arg2[%c0, %c0_0] : memref<8x32xbf16, #tpu.memory_space<vmem>>, vector<8x32xbf16>
    %c0_1 = arith.constant 0 : index
    %c0_2 = arith.constant 0 : index
    %1 = vector.load %arg1[%c0_1, %c0_2] : memref<2x32xbf16, #tpu.memory_space<vmem>>, vector<2x32xbf16>
    %cst = arith.constant dense<0.000000e+00> : vector<8x2xf32>
    %2 = tpu.matmul %0, %1, %cst {dimension_numbers = #tpu.dot_dimension_numbers<[1], [1], [0], [0], [0, 0, 1, 0], [], []>} : vector<8x32xbf16>, vector<2x32xbf16>, vector<8x2xf32> -> vector<8x2xf32>
    %c0_3 = arith.constant 0 : index
    %c0_4 = arith.constant 0 : index
    %3 = vector.load %arg3[%c0_3, %c0_4] : memref<8x1xf32, #tpu.memory_space<vmem>>, vector<8x1xf32>
    %4 = vector.broadcast %3 : vector<8x1xf32> to vector<8x2xf32>
    %5 = arith.addf %2, %4 : vector<8x2xf32>
    %cst_5 = arith.constant dense<0xFF800000> : vector<2xf32>
    %6 = vector.multi_reduction <maximumf>, %5, %cst_5 [0] : vector<8x2xf32> to vector<2xf32>
    %7 = vector.shape_cast %6 : vector<2xf32> to vector<1x2xf32>
    %8 = vector.broadcast %7 : vector<1x2xf32> to vector<8x2xf32>
    %9 = arith.subf %5, %8 : vector<8x2xf32>
    %10 = math.exp %9 : vector<8x2xf32>
    %cst_6 = arith.constant dense<0.000000e+00> : vector<2xf32>
    %11 = vector.multi_reduction <add>, %10, %cst_6 [0] : vector<8x2xf32> to vector<2xf32>
    %12 = vector.shape_cast %11 : vector<2xf32> to vector<1x2xf32>
    %13 = tpu.iota {dimensions = array<i32: 1>} : vector<3x8xi32>
    %c2_i32 = arith.constant 2 : i32
    %14 = vector.broadcast %c2_i32 : i32 to vector<3x8xi32>
    %c6_i32 = arith.constant 6 : i32
    %15 = vector.broadcast %c6_i32 : i32 to vector<3x8xi32>
    %16 = arith.cmpi eq, %13, %15 : vector<3x8xi32>
    %c1_i32 = arith.constant 1 : i32
    %17 = vector.broadcast %c1_i32 : i32 to vector<3x8xi32>
    %18 = arith.select %16, %17, %14 : vector<3x8xi1>, vector<3x8xi32>
    %c5_i32 = arith.constant 5 : i32
    %19 = vector.broadcast %c5_i32 : i32 to vector<3x8xi32>
    %20 = arith.cmpi eq, %13, %19 : vector<3x8xi32>
    %c0_i32 = arith.constant 0 : i32
    %21 = vector.broadcast %c0_i32 : i32 to vector<3x8xi32>
    %22 = arith.select %20, %21, %18 : vector<3x8xi1>, vector<3x8xi32>
    %c4_i32 = arith.constant 4 : i32
    %23 = vector.broadcast %c4_i32 : i32 to vector<3x8xi32>
    %24 = arith.cmpi eq, %13, %23 : vector<3x8xi32>
    %c2_i32_7 = arith.constant 2 : i32
    %25 = vector.broadcast %c2_i32_7 : i32 to vector<3x8xi32>
    %26 = arith.select %24, %25, %22 : vector<3x8xi1>, vector<3x8xi32>
    %c3_i32 = arith.constant 3 : i32
    %27 = vector.broadcast %c3_i32 : i32 to vector<3x8xi32>
    %28 = arith.cmpi eq, %13, %27 : vector<3x8xi32>
    %c2_i32_8 = arith.constant 2 : i32
    %29 = vector.broadcast %c2_i32_8 : i32 to vector<3x8xi32>
    %30 = arith.select %28, %29, %26 : vector<3x8xi1>, vector<3x8xi32>
    %c2_i32_9 = arith.constant 2 : i32
    %31 = vector.broadcast %c2_i32_9 : i32 to vector<3x8xi32>
    %32 = arith.cmpi eq, %13, %31 : vector<3x8xi32>
    %c0_i32_10 = arith.constant 0 : i32
    %33 = vector.broadcast %c0_i32_10 : i32 to vector<3x8xi32>
    %34 = arith.select %32, %33, %30 : vector<3x8xi1>, vector<3x8xi32>
    %c1_i32_11 = arith.constant 1 : i32
    %35 = vector.broadcast %c1_i32_11 : i32 to vector<3x8xi32>
    %36 = arith.cmpi eq, %13, %35 : vector<3x8xi32>
    %c1_i32_12 = arith.constant 1 : i32
    %37 = vector.broadcast %c1_i32_12 : i32 to vector<3x8xi32>
    %38 = arith.select %36, %37, %34 : vector<3x8xi1>, vector<3x8xi32>
    %c0_i32_13 = arith.constant 0 : i32
    %39 = vector.broadcast %c0_i32_13 : i32 to vector<3x8xi32>
    %40 = arith.cmpi eq, %13, %39 : vector<3x8xi32>
    %c2_i32_14 = arith.constant 2 : i32
    %41 = vector.broadcast %c2_i32_14 : i32 to vector<3x8xi32>
    %42 = arith.select %40, %41, %38 : vector<3x8xi1>, vector<3x8xi32>
    %43 = tpu.iota {dimensions = array<i32: 0>} : vector<3x8xi32>
    %44 = arith.cmpi eq, %42, %43 : vector<3x8xi32>
    %45 = arith.extui %44 : vector<3x8xi1> to vector<3x8xi32>
    %46 = arith.sitofp %45 : vector<3x8xi32> to vector<3x8xf32>
    %cst_15 = arith.constant dense<0.000000e+00> : vector<3x2xf32>
    %47 = tpu.matmul %46, %10, %cst_15 {dimension_numbers = #tpu.dot_dimension_numbers<[1], [0], [0], [1], [0, 0, 1, 1], [], []>} : vector<3x8xf32>, vector<8x2xf32>, vector<3x2xf32> -> vector<3x2xf32>
    %48 = vector.broadcast %12 : vector<1x2xf32> to vector<3x2xf32>
    %49 = arith.divf %47, %48 : vector<3x2xf32>
    %c0_16 = arith.constant 0 : index
    %c0_17 = arith.constant 0 : index
    %50 = vector.load %arg5[%c0_16, %c0_17] : memref<3x2xf32, #tpu.memory_space<vmem>>, vector<3x2xf32>
    tpu.vector_store %arg5[%c0_16, %c0_17], %49 {strides = array<i32>} : memref<3x2xf32, #tpu.memory_space<vmem>>, vector<3x2xf32>,
    %cst_18 = arith.constant 1.000000e-30 : f32
    %51 = vector.broadcast %cst_18 : f32 to vector<3x2xf32>
    %52 = arith.maximumf %47, %51 : vector<3x2xf32>
    %53 = math.log %52 : vector<3x2xf32>
    %54 = math.log %12 : vector<1x2xf32>
    %55 = vector.broadcast %54 : vector<1x2xf32> to vector<3x2xf32>
    %56 = arith.subf %53, %55 : vector<3x2xf32>
    %57 = tpu.iota {dimensions = array<i32: 0>} : vector<3x2xi32>
    %c0_19 = arith.constant 0 : index
    %c0_20 = arith.constant 0 : index
    %58 = vector.load %arg4[%c0_19, %c0_20] : memref<1x2xi32, #tpu.memory_space<vmem>>, vector<1x2xi32>
    %59 = vector.broadcast %58 : vector<1x2xi32> to vector<3x2xi32>
    %60 = arith.cmpi eq, %57, %59 : vector<3x2xi32>
    %cst_21 = arith.constant 0.000000e+00 : f32
    %61 = vector.broadcast %cst_21 : f32 to vector<3x2xf32>
    %62 = arith.select %60, %56, %61 : vector<3x2xi1>, vector<3x2xf32>
    %63 = vector.shape_cast %62 : vector<3x2xf32> to vector<1x3x2xf32>
    %cst_22 = arith.constant dense<0.000000e+00> : vector<1xf32>
    %64 = vector.multi_reduction <add>, %63, %cst_22 [1, 2] : vector<1x3x2xf32> to vector<1xf32>
    %65 = vector.shape_cast %64 : vector<1xf32> to vector<1x1x1xf32>
    %66 = vector.extract %65[0, 0, 0] : f32 from vector<1x1x1xf32>
    %cst_23 = arith.constant 0.000000e+00 : f32
    %67 = arith.subf %cst_23, %66 : f32
    %c0_24 = arith.constant 0 : index
    %c0_25 = arith.constant 0 : index
    %68 = memref.load %arg6[%c0_24, %c0_25] : memref<1x1xf32, #tpu.memory_space<smem>>
    memref.store %67, %arg6[%c0_24, %c0_25] : memref<1x1xf32, #tpu.memory_space<smem>>
    return
  }
  func.func @transform_0(%arg0: i32) -> (i32, i32) {
    %c0_i32 = arith.constant 0 : i32
    %c0_i32_0 = arith.constant 0 : i32
    return %arg0, %c0_i32 : i32, i32
  }
  func.func @transform_1(%arg0: i32) -> (i32, i32) {
    %c0_i32 = arith.constant 0 : i32
    %c0_i32_0 = arith.constant 0 : i32
    %c0_i32_1 = arith.constant 0 : i32
    return %c0_i32, %c0_i32_0 : i32, i32
  }
  func.func @transform_2(%arg0: i32) -> (i32, i32) {
    %c0_i32 = arith.constant 0 : i32
    %c0_i32_0 = arith.constant 0 : i32
    %c0_i32_1 = arith.constant 0 : i32
    return %c0_i32, %c0_i32_0 : i32, i32
  }
  func.func @transform_3(%arg0: i32) -> (i32, i32) {
    %c0_i32 = arith.constant 0 : i32
    %c0_i32_0 = arith.constant 0 : i32
    return %c0_i32, %arg0 : i32, i32
  }
  func.func @transform_4(%arg0: i32) -> (i32, i32) {
    %c0_i32 = arith.constant 0 : i32
    %c0_i32_0 = arith.constant 0 : i32
    return %c0_i32, %arg0 : i32, i32
  }
  func.func @transform_5(%arg0: i32) -> (i32, i32) {
    %c0_i32 = arith.constant 0 : i32
    %c0_i32_0 = arith.constant 0 : i32
    return %arg0, %c0_i32 : i32, i32
  }
}

</mosaic_0001>

<llo_original>
// kernel: tpu_custom_call.1
$region0: #{tpu_custom_call.1}
  #allocation0 [shape = 'u32[]', space=smem, size = 0x4, offset = 0x4, fixed_abs, tag = 'smem constant byte address 0x4 - core index']
  #allocation1 [shape = 'u32[144,128]{1,0:T(1,128)}', space=vmem, size = 0x12000, scoped, tag = 'internal scratch']
  %s0 = inlined_call_operand.vmem [shape: bf16[2,32], index: 0, kind: input, shape index: {}]
  %s1 = inlined_call_operand.vmem [shape: bf16[8,32], index: 1, kind: input, shape index: {}]
  %s2 = inlined_call_operand.vmem [shape: f32[8,1], index: 2, kind: input, shape index: {}]
  %s3 = inlined_call_operand.vmem [shape: s32[1,2], index: 3, kind: input, shape index: {}]
  %s4 = inlined_call_operand.vmem [shape: f32[3,2], index: 4, kind: output, shape index: {0}]
  %s5 = inlined_call_operand.hbm [shape: f32[1,1], index: 5, kind: output, shape index: {1}]
  %6 = xla_tuple %s4, %s5
  %s7 = sld [smem:[#allocation0]]
  $region34: #{tpu_custom_call.1} parent=0
    _
  %s9 = ssub.s32 1, %s7
  %s10 = scalar_select 0, %s9, %s7
  $region1: #{tpu_custom_call.1} parent=0
    #allocation2 [shape = 'u8[512]{0}', space=smem, size = 0x200, scoped, tag = 'output window, operand 1, single buffered']
    #allocation3 [shape = 's32[1]{0}', space=sflag, size = 0x4, scoped, tag = 'scoped memory for tpu_custom_call.1']
    %11 = vsyncpa [#allocation3], 0
    // Predicated region
    $region2: #{tpu_custom_call.1} parent=1 // pred_check
      _
    $region3: #{tpu_custom_call.1} parent=1 // pred_check_branch
      %13 = sbr.rel (0) target = $region5
    $region4: #{tpu_custom_call.1} parent=1 // pred_region
      _
    $region5: #{tpu_custom_call.1} parent=1 // pred_fallthru
      _
    // Predicated region
    $region6: #{tpu_custom_call.1} parent=1 // pred_check
      _
    $region7: #{tpu_custom_call.1} parent=1 // pred_check_branch
      %15 = sbr.rel (0) target = $region9
    $region8: #{tpu_custom_call.1} parent=1 // pred_region
      _
    $region9: #{tpu_custom_call.1} parent=1 // pred_fallthru
      _
    // Predicated region
    $region10: #{tpu_custom_call.1} parent=1 // pred_check
      _
    $region11: #{tpu_custom_call.1} parent=1 // pred_check_branch
      %17 = sbr.rel (0) target = $region13
    $region12: #{tpu_custom_call.1} parent=1 // pred_region
      _
    $region13: #{tpu_custom_call.1} parent=1 // pred_fallthru
      _
    // Predicated region
    $region14: #{tpu_custom_call.1} parent=1 // pred_check
      _
    $region15: #{tpu_custom_call.1} parent=1 // pred_check_branch
      %19 = sbr.rel (0) target = $region17
    $region16: #{tpu_custom_call.1} parent=1 // pred_region
      _
    $region17: #{tpu_custom_call.1} parent=1 // pred_fallthru
      _
    %v21 = vld [vmem:[%s1] sm:$0xf]
    %v22 = vld [vmem:[%s0] sm:$0x1]
    %v23 = vld [vmem:[%s2] sm:$0xff]
    %25 = vset.pattern.permute.xlu0 0
    %26 = vperm.xlu0 %25, %v23
    %v27 = vpop.permute.xlu0 %26
    %vm29 = vcmask 261120
    %v31 = vsel %vm29, %v21, 0
    %v34 = vsel %vm29, %v22, 0
    %36 = vmatprep.subr.bf16.mxu0 0
    %37 = vmatpush1.bf16.xpose.msra.mxu0 0
    %38 = vmatprep.subr.bf16.mxu0 0
    %39 = vmatpush1.bf16.xpose.msra.mxu0 0
    %40 = vmatprep.subr.bf16.mxu0 0
    %41 = vmatpush1.bf16.xpose.msra.mxu0 0
    %42 = vmatprep.subr.bf16.mxu0 0
    %43 = vmatpush1.bf16.xpose.msra.mxu0 0
    %44 = vmatprep.subr.bf16.mxu0 0
    %45 = vmatpush1.bf16.xpose.msra.mxu0 0
    %46 = vmatprep.subr.bf16.mxu0 0
    %47 = vmatpush1.bf16.xpose.msra.mxu0 0
    %48 = vmatprep.subr.bf16.mxu0 0
    %49 = vmatpush1.bf16.xpose.msra.mxu0 0
    %50 = vmatprep.subr.bf16.mxu0 0
    %51 = vmatpush1.bf16.xpose.msra.mxu0 %v34
    %52 = vmatprep.subr.bf16.mxu0 0
    %53 = vmatpush2.bf16.xpose.msra.mxu0 0
    %54 = vmatprep.subr.bf16.mxu0 0
    %55 = vmatpush2.bf16.xpose.msra.mxu0 0
    %56 = vmatprep.subr.bf16.mxu0 0
    %57 = vmatpush2.bf16.xpose.msra.mxu0 0
    %58 = vmatprep.subr.bf16.mxu0 0
    %59 = vmatpush2.bf16.xpose.msra.mxu0 0
    %60 = vmatprep.subr.bf16.mxu0 0
    %61 = vmatpush2.bf16.xpose.msra.mxu0 0
    %62 = vmatprep.subr.bf16.mxu0 0
    %63 = vmatpush2.bf16.xpose.msra.mxu0 0
    %64 = vmatprep.subr.bf16.mxu0 0
    %65 = vmatpush2.bf16.xpose.msra.mxu0 0
    %66 = vmatprep.subr.bf16.mxu0 0
    %67 = vmatpush2.bf16.xpose.msra.mxu0 0
    %68 = vmatprep.mubr.bf16.mxu0 0
    %69 = vmatmul.mubr.bf16.gmra.mxu0 %v31
    %v70 = vpop.f32.mrf.mxu0
    %v71 = vadd.f32 %v27, %v70
    %v72 = vpop.f32.mrf.mxu0
    %v73 = vpop.f32.mrf.mxu0
    %v74 = vpop.f32.mrf.mxu0
    %75 = vdwg.mxu0
    %vm76 = vcmask 15360
    %v77 = vsel %vm76, %v71, -inf
    %v78 = vrot.slane %v77, 4
    %v79 = vmax.f32 %v77, %v78
    %v80 = vrot.slane %v79, 2
    %v81 = vmax.f32 %v79, %v80
    %v82 = vrot.slane %v81, 1
    %v83 = vmax.f32 %v81, %v82
    %v84 = vsub.f32 %v71, %v83
    %v85 = vmul.f32 %v84, 1.442695
    %v86 = vpow.pop %v85
    %v87 = vsel %vm76, %v86, 0.0
    %v88 = vrot.slane %v87, 4
    %v89 = vadd.f32 %v87, %v88
    %v90 = vrot.slane %v89, 2
    %v91 = vadd.f32 %v89, %v90
    %v92 = vrot.slane %v91, 1
    %v93 = vadd.f32 %v91, %v92
    %v94 = vlaneseq
    %v95 = vand.u32 %v94, 127
    %vm96 = vcmp.eq.s32.totalorder %v95, 6
    %v97 = vsel %vm96, 1, 2
    %vm98 = vcmp.eq.s32.totalorder %v95, 5
    %v99 = vsel %vm98, 0, %v97
    %vm100 = vcmp.eq.s32.totalorder %v95, 4
    %v101 = vsel %vm100, 2, %v99
    %vm102 = vcmp.eq.s32.totalorder %v95, 3
    %v103 = vsel %vm102, 2, %v101
    %vm104 = vcmp.eq.s32.totalorder %v95, 2
    %v105 = vsel %vm104, 0, %v103
    %vm106 = vcmp.eq.s32.totalorder %v95, 1
    %v107 = vsel %vm106, 1, %v105
    %vm108 = vcmp.eq.s32.totalorder %v95, 0
    %v109 = vsel %vm108, 2, %v107
    %v110 = vlaneseq
    %v111 = vshrl.u32 %v110, 7
    %vm112 = vcmp.eq.s32.totalorder %v109, %v111
    %v113 = vsel %vm112, 1, 0
    %v114 = vcvt.s32.f32 %v113
    %vm115 = vcmask 64512
    %v117 = vsel %vm115, %v114, 0
    %119 = vmatprep.subr.mxu0 0.0
    %120 = vmatpush1.msra.mxu0 0.0
    %121 = vmatprep.subr.mxu0 0.0
    %122 = vmatpush1.msra.mxu0 0.0
    %123 = vmatprep.subr.mxu0 0.0
    %124 = vmatpush1.msra.mxu0 0.0
    %125 = vmatprep.subr.mxu0 0.0
    %126 = vmatpush1.msra.mxu0 0.0
    %127 = vmatprep.subr.mxu0 0.0
    %128 = vmatpush1.msra.mxu0 0.0
    %129 = vmatprep.subr.mxu0 0.0
    %130 = vmatpush1.msra.mxu0 0.0
    %131 = vmatprep.subr.mxu0 0.0
    %132 = vmatpush1.msra.mxu0 0.0
    %133 = vmatprep.subr.mxu0 0.0
    %134 = vmatpush1.msra.mxu0 0.0
    %135 = vmatprep.subr.mxu0 0.0
    %136 = vmatpush1.msra.mxu0 0.0
    %137 = vmatprep.subr.mxu0 0.0
    %138 = vmatpush1.msra.mxu0 0.0
    %139 = vmatprep.subr.mxu0 0.0
    %140 = vmatpush1.msra.mxu0 0.0
    %141 = vmatprep.subr.mxu0 0.0
    %142 = vmatpush1.msra.mxu0 0.0
    %143 = vmatprep.subr.mxu0 0.0
    %144 = vmatpush1.msra.mxu0 0.0
    %145 = vmatprep.subr.mxu0 0.0
    %146 = vmatpush1.msra.mxu0 0.0
    %147 = vmatprep.subr.mxu0 0.0
    %148 = vmatpush1.msra.mxu0 0.0
    %149 = vmatprep.subr.mxu0 0.0
    %150 = vmatpush1.msra.mxu0 %v86
    %151 = vmatprep.subr.mxu0 0.0
    %152 = vmatpush2.msra.mxu0 0.0
    %153 = vmatprep.subr.mxu0 0.0
    %154 = vmatpush2.msra.mxu0 0.0
    %155 = vmatprep.subr.mxu0 0.0
    %156 = vmatpush2.msra.mxu0 0.0
    %157 = vmatprep.subr.mxu0 0.0
    %158 = vmatpush2.msra.mxu0 0.0
    %159 = vmatprep.subr.mxu0 0.0
    %160 = vmatpush2.msra.mxu0 0.0
    %161 = vmatprep.subr.mxu0 0.0
    %162 = vmatpush2.msra.mxu0 0.0
    %163 = vmatprep.subr.mxu0 0.0
    %164 = vmatpush2.msra.mxu0 0.0
    %165 = vmatprep.subr.mxu0 0.0
    %166 = vmatpush2.msra.mxu0 0.0
    %167 = vmatprep.subr.mxu0 0.0
    %168 = vmatpush2.msra.mxu0 0.0
    %169 = vmatprep.subr.mxu0 0.0
    %170 = vmatpush2.msra.mxu0 0.0
    %171 = vmatprep.subr.mxu0 0.0
    %172 = vmatpush2.msra.mxu0 0.0
    %173 = vmatprep.subr.mxu0 0.0
    %174 = vmatpush2.msra.mxu0 0.0
    %175 = vmatprep.subr.mxu0 0.0
    %176 = vmatpush2.msra.mxu0 0.0
    %177 = vmatprep.subr.mxu0 0.0
    %178 = vmatpush2.msra.mxu0 0.0
    %179 = vmatprep.subr.mxu0 0.0
    %180 = vmatpush2.msra.mxu0 0.0
    %181 = vmatprep.subr.mxu0 0.0
    %182 = vmatpush2.msra.mxu0 0.0
    %183 = vmatprep.mubr.f32.mxu0 0.0
    %184 = vmatmul.mubr.f32.gmra.mxu0 %v117
    %v185 = vpop.f32.mrf.mxu0
    %v186 = vadd.f32 0.0, %v185
    %v187 = vpop.f32.mrf.mxu0
    %188 = vdwg.mxu0
    %v189 = vrcp.pop %v93
    %v190 = vmul.f32 %v186, %v189
    %vm191 = vcmask 10240
    %192 = vst.msk [vmem:[%s4] sm:$0x7] %vm191, %v190
    %v193 = vmax.f32 %v186, 1e-30
    %v194 = vlog2.pop %v193
    %v195 = vmul.f32 %v194, 0.6931472
    %v196 = vlog2.pop %v93
    %v197 = vmul.f32 %v196, 0.6931472
    %v198 = vsub.f32 %v195, %v197
    %v199 = vld [vmem:[%s3] sm:$0x1]
    %v200 = vlaneseq
    %v201 = vshrl.u32 %v200, 7
    %v202 = vsub.s32 0, %v201
    %v203 = vrot.slane %v199, %v202
    %vm204 = vcmp.eq.s32.totalorder %v111, %v203
    %v205 = vsel %vm204, %v198, 0.0
    %v206 = vsel %vm191, %v205, 0.0
    %207 = vadd.xlane.f32.xlu0 %v206
    %v208 = vpop.xlane.xlu0 %207
    %v209 = vrot.slane %v208, 4
    %v210 = vadd.f32 %v208, %v209
    %v211 = vrot.slane %v210, 2
    %v212 = vadd.f32 %v210, %v211
    %v213 = vrot.slane %v212, 1
    %v214 = vadd.f32 %v212, %v213
    %s215 = vtos %v214
    %s216 = ssub.f32 0.0, %s215
    %s217 = scalar_lea.smem [#allocation2], 0
    %218 = sst [smem:[%s217]] %s216
    // Predicated region
    $region18: #{tpu_custom_call.1} parent=1 // pred_check
      _
    $region19: #{tpu_custom_call.1} parent=1 // pred_check_branch
      %220 = sbr.rel (0) target = $region21
    $region20: #{tpu_custom_call.1} parent=1 // pred_region
      _
    $region21: #{tpu_custom_call.1} parent=1 // pred_fallthru
      _
    // Predicated region
    $region22: #{tpu_custom_call.1} parent=1 // pred_check
      _
    $region23: #{tpu_custom_call.1} parent=1 // pred_check_branch
      %222 = sbr.rel (0) target = $region25
    $region24: #{tpu_custom_call.1} parent=1 // pred_region
      %s224 = ssub.s32 16, 16
      %225 = vsyncadd [#allocation3], %s224
      %228 = dma.smem_to_hbm [#allocation2], 16, %s5, [#allocation3]
    $region25: #{tpu_custom_call.1} parent=1 // pred_fallthru
      _
    // Predicated region
    $region26: #{tpu_custom_call.1} parent=1 // pred_check
      _
    $region27: #{tpu_custom_call.1} parent=1 // pred_check_branch
      %230 = sbr.rel (0) target = $region29
    $region28: #{tpu_custom_call.1} parent=1 // pred_region
      _
    $region29: #{tpu_custom_call.1} parent=1 // pred_fallthru
      _
    // Predicated region
    $region30: #{tpu_custom_call.1} parent=1 // pred_check
      _
    $region31: #{tpu_custom_call.1} parent=1 // pred_check_branch
      %232 = sbr.rel (0) target = $region33
    $region32: #{tpu_custom_call.1} parent=1 // pred_region
      %233 = dma.done [#allocation3], 16
    $region33: #{tpu_custom_call.1} parent=1 // pred_fallthru
      _
    %234 = sfence
    %235 = vsyncpa [#allocation3], 1

</llo_original>
